<compile_context>
chip_gen: v5e
topology: v5e:2x2
jax: 0.10.0
libtpu: 0.0.40
codegen_flags: <defaults>
</compile_context>

<pallas_src>
import functools

import jax
import jax.numpy as jnp
import numpy as np
from jax import lax
from jax.experimental import pallas as pl
from jax.experimental.pallas import tpu as pltpu

BN_EPS = 1e-5
LANE = 128


def _round_up(v, m):
    return (v + m - 1) // m * m


def _default_tile_n(n_pts):
    """Biggest point tile that comfortably fits VMEM for this chip gen."""
    try:
        vmem = pltpu.get_tpu_info().vmem_capacity_bytes
    except Exception:  # conservative fallback
        vmem = 64 << 20
    cap = 2048 if vmem >= (96 << 20) else 1024   # v5e/v6e: 128 MiB, v7x: 64 MiB
    return n_pts if n_pts <= cap else cap


# --------------------------------------------------------------------------
# Kernels
# --------------------------------------------------------------------------
def _chain_max_kernel(x_ref, w1_ref, b1_ref, w2_ref, b2_ref, w3_ref, b3_ref,
                      o_ref, *, n_total, tile_n, cin, final_relu):
    """conv1x1(+BN)+ReLU -> conv1x1+ReLU -> conv1x1 -> running max over points.

    Layer-3 bias and the optional final ReLU are applied once to the (1, coutp)
    accumulator at the last grid step, not per row.
    """
    n_idx = pl.program_id(1)
    last = pl.num_programs(1) - 1

    # ---- layer 1: tiny contraction (K = feat_dim) -> VPU broadcast-FMAs ----
    if cin <= 8:
        xf = x_ref[...].astype(jnp.float32)
        h = b1_ref[...]
        for j in range(cin):
            h = h + xf[:, j:j + 1] * w1_ref[j:j + 1, :].astype(jnp.float32)
    else:
        h = (jnp.dot(x_ref[...], w1_ref[...],
                     preferred_element_type=jnp.float32) + b1_ref[...])
    h = jnp.maximum(h, 0.0).astype(jnp.bfloat16)

    # ---- layer 2 ----
    h = (jnp.dot(h, w2_ref[...], preferred_element_type=jnp.float32)
         + b2_ref[...])
    h = jnp.maximum(h, 0.0).astype(jnp.bfloat16)

    # ---- layer 3: raw product only (bias/ReLU hoisted to the epilogue) ----
    y = jnp.dot(h, w3_ref[...], preferred_element_type=jnp.float32)

    @pl.when(n_idx == 0)
    def _():
        o_ref[...] = jnp.full(o_ref.shape, -jnp.inf, o_ref.dtype)

    if n_total % tile_n != 0:
        valid_last = n_total % tile_n   # valid rows in the final tile (static)

        @pl.when(n_idx == last)
        def _():
            # Narrow (tile_n, 1) predicate; mask padded/garbage tail rows to
            # -inf on the PRE-bias product so they can never win the max.
            rid = lax.broadcasted_iota(jnp.int32, (tile_n, 1), 0)
            ym = jnp.where(rid < valid_last, y, -jnp.inf)
            o_ref[...] = jnp.maximum(o_ref[...],
                                     jnp.max(ym, axis=0, keepdims=True))

        @pl.when(n_idx != last)
        def _():
            o_ref[...] = jnp.maximum(o_ref[...],
                                     jnp.max(y, axis=0, keepdims=True))
    else:
        o_ref[...] = jnp.maximum(o_ref[...],
                                 jnp.max(y, axis=0, keepdims=True))

    # ---- epilogue on the (1, coutp) accumulator, last tile only ----
    @pl.when(n_idx == last)
    def _():
        acc = o_ref[...] + b3_ref[...]
        if final_relu:
            acc = jnp.maximum(acc, 0.0)
        o_ref[...] = acc


def _stn_head_fold_kernel(g_ref, w1_ref, b1_ref, w2_ref, b2_ref, w3_ref,
                          b3_ref, e_ref, o_ref):
    """fc1+bn+relu -> fc2+bn+relu -> fc3 (+identity) -> fold into conv1 weight.

    With E = kron(I_k, W1c), (t @ E).reshape(k, 64) == T @ W1c, so the kernel
    directly emits the per-batch effective trunk-conv1 weight (B, k*64).
    """
    g = g_ref[...].astype(jnp.bfloat16)
    h = (jnp.dot(g, w1_ref[...], preferred_element_type=jnp.float32)
         + b1_ref[...])
    h = jnp.maximum(h, 0.0).astype(jnp.bfloat16)
    h = (jnp.dot(h, w2_ref[...], preferred_element_type=jnp.float32)
         + b2_ref[...])
    h = jnp.maximum(h, 0.0).astype(jnp.bfloat16)
    t = (jnp.dot(h, w3_ref[...], preferred_element_type=jnp.float32)
         + b3_ref[...])                                   # (B, k*k), f32
    o_ref[...] = jnp.dot(t, e_ref[...],
                         preferred_element_type=jnp.float32).astype(jnp.bfloat16)


# --------------------------------------------------------------------------
# pallas_call wrappers
# --------------------------------------------------------------------------
def conv_chain_max(x_bf16, w1, b1, w2, b2, w3, b3, *, tile_n, final_relu,
                   vmem_limit_bytes):
    """Fused 3-layer conv1x1 chain + max over points.

    x_bf16: (B, N, Cin) bf16.  w1 is (1, Cin, C1) (shared) or (B, Cin, C1)
    (per-batch, STN transform pre-folded).  Returns (B, Cout) f32.
    """
    B, N, cin = x_bf16.shape
    c1 = w1.shape[-1]
    coutp = w3.shape[-1]
    n_tiles = pl.cdiv(N, tile_n)
    w1_map = ((lambda b, n: (0, 0, 0)) if w1.shape[0] == 1
              else (lambda b, n: (b, 0, 0)))
    out = pl.pallas_call(
        functools.partial(_chain_max_kernel, n_total=N, tile_n=tile_n,
                          cin=cin, final_relu=final_relu),
        out_shape=jax.ShapeDtypeStruct((B, 1, coutp), jnp.float32),
        grid=(B, n_tiles),
        in_specs=[
            pl.BlockSpec((None, tile_n, cin), lambda b, n: (b, n, 0)),
            pl.BlockSpec((None, cin, c1), w1_map),
            pl.BlockSpec(b1.shape, lambda b, n: (0, 0)),
            pl.BlockSpec(w2.shape, lambda b, n: (0, 0)),
            pl.BlockSpec(b2.shape, lambda b, n: (0, 0)),
            pl.BlockSpec(w3.shape, lambda b, n: (0, 0)),
            pl.BlockSpec(b3.shape, lambda b, n: (0, 0)),
        ],
        out_specs=pl.BlockSpec((None, 1, coutp), lambda b, n: (b, 0, 0)),
        compiler_params=pltpu.CompilerParams(
            dimension_semantics=("parallel", "arbitrary"),
            vmem_limit_bytes=vmem_limit_bytes),
    )(x_bf16, w1, b1, w2, b2, w3, b3)
    return out.reshape(B, coutp)


def stn_head_fold(g, p):
    """Fused STN fc head (1024->512->256->k*k) + conv1-weight fold.

    Returns the per-batch effective trunk conv1 weight, flat (B, k*64) bf16.
    """
    B = g.shape[0]
    w1, b1 = p["stn_f1"]
    w2, b2 = p["stn_f2"]
    w3, b3 = p["stn_f3"]
    e = p["c1_fold"]
    return pl.pallas_call(
        _stn_head_fold_kernel,
        out_shape=jax.ShapeDtypeStruct((B, e.shape[-1]), jnp.bfloat16),
    )(g, w1, b1, w2, b2, w3, b3, e)


# --------------------------------------------------------------------------
# Deterministic parameter construction (synthetic; mirrors __init__ shapes)
# --------------------------------------------------------------------------
def _fold_layer(key, cin, cout, *, bn, extra_shift=None,
                w_dtype=jnp.bfloat16, pad_cout=None):
    """Returns (w_folded, shift): BN scale folded into the weight columns."""
    kw, kb, kg, kbt, km, kv = jax.random.split(key, 6)
    w = jax.random.normal(kw, (cin, cout), jnp.float32) / np.sqrt(cin)
    bias = 0.05 * jax.random.normal(kb, (cout,), jnp.float32)
    if bn:
        gamma = 1.0 + 0.1 * jax.random.normal(kg, (cout,), jnp.float32)
        beta = 0.1 * jax.random.normal(kbt, (cout,), jnp.float32)
        mean = 0.1 * jax.random.normal(km, (cout,), jnp.float32)
        var = jax.random.uniform(kv, (cout,), jnp.float32, 0.5, 1.5)
        scale = gamma / jnp.sqrt(var + BN_EPS)
        w = w * scale[None, :]                 # fold BN scale into weight cols
        shift = beta + scale * (bias - mean)
    else:
        shift = bias
    if extra_shift is not None:
        shift = shift + extra_shift.reshape(-1)
    if pad_cout is not None and pad_cout > cout:  # lane-dense output width
        w = jnp.pad(w, ((0, 0), (0, pad_cout - cout)))
        shift = jnp.pad(shift, (0, pad_cout - cout))
        cout = pad_cout
    return w.astype(w_dtype), shift.reshape(1, cout).astype(jnp.float32)


def make_params(key, feat_dim, hidden_size, global_feat=True):
    gfd = hidden_size if global_feat else hidden_size - 64
    gfd_p = _round_up(gfd, LANE)
    k = feat_dim
    keys = jax.random.split(key, 9)
    eye_flat = jnp.eye(k, dtype=jnp.float32).reshape(k * k)   # STN identity add
    w_stn1, b_stn1 = _fold_layer(keys[0], k, 64, bn=True)
    # Trunk conv1 kept f32 so the transform-fold matrix stays f32-accurate.
    w_c1, b_c1 = _fold_layer(keys[6], k, 64, bn=True, w_dtype=jnp.float32)
    c1_fold = jnp.kron(jnp.eye(k, dtype=jnp.float32), w_c1)   # (k*k, k*64)
    return {
        # STNkd(k=feat_dim)
        "stn_c1": (w_stn1[None], b_stn1),      # shared first conv weight (1,k,64)
        "stn_c2": _fold_layer(keys[1], 64, 128, bn=True),
        "stn_c3": _fold_layer(keys[2], 128, 1024, bn=True),
        "stn_f1": _fold_layer(keys[3], 1024, 512, bn=True),
        "stn_f2": _fold_layer(keys[4], 512, 256, bn=True),
        "stn_f3": _fold_layer(keys[5], 256, k * k, bn=False, extra_shift=eye_flat),
        # main trunk
        "c1_fold": c1_fold,                    # E = kron(I_k, W1c), f32
        "c1_shift": b_c1,                      # (1, 64)
        "c2": _fold_layer(keys[7], 64, 128, bn=True),
        "c3": _fold_layer(keys[8], 128, gfd, bn=True, pad_cout=gfd_p),
        "gfd": gfd,
        "k": k,
    }


# --------------------------------------------------------------------------
# Forward pass (global_feat=True, feature_transform=False)
# --------------------------------------------------------------------------
def pointnetfeat_lite_forward(x, p, *, tile_n=None, vmem_limit_bytes=64 << 20):
    """x: (B, n_pts, feat_dim) f32  ->  (B, global_feat_dim) f32."""
    B, N, k = x.shape
    if tile_n is None:
        tile_n = _default_tile_n(N)
    x_bf16 = x.astype(jnp.bfloat16)            # bf16 MXU inputs, f32 accumulation

    # ---- STNkd: fused conv chain + max, then fused fc head + conv1 fold ----
    g = conv_chain_max(x_bf16, *p["stn_c1"], *p["stn_c2"], *p["stn_c3"],
                       tile_n=tile_n, final_relu=True,
                       vmem_limit_bytes=vmem_limit_bytes)         # (B, 1024)
    w1_eff = stn_head_fold(g, p).reshape(B, k, 64)                # (B, k, 64) bf16

    # ---- main trunk: fused conv chain + max (bn3, no final ReLU) ----
    out = conv_chain_max(x_bf16, w1_eff, p["c1_shift"], *p["c2"], *p["c3"],
                         tile_n=tile_n, final_relu=False,
                         vmem_limit_bytes=vmem_limit_bytes)       # (B, gfd_padded)
    return out[:, :p["gfd"]]


if __name__ == "__main__":
    B, N, FEAT_DIM, HIDDEN = 2, 16, 4, 32  # module input: (batch, n_pts, feat_dim)
    key = jax.random.PRNGKey(0)
    kx, kp = jax.random.split(key)
    x = jax.random.normal(kx, (B, N, FEAT_DIM), jnp.float32)
    params = make_params(kp, FEAT_DIM, HIDDEN, global_feat=True)

    out = pointnetfeat_lite_forward(x, params)
    out = jax.block_until_ready(out)

    assert out.shape == (B, HIDDEN), out.shape
    assert out.dtype == jnp.float32
    assert bool(jnp.all(jnp.isfinite(out)))
    print("KERNEL_OK")
</pallas_src>

<mosaic_0001>
module attributes {stable_mosaic.version = 11 : i64} {
  func.func @_chain_max_kernel(%arg0: i32, %arg1: i32, %arg2: memref<1x16x4xbf16, #tpu.memory_space<vmem>>, %arg3: memref<1x4x64xbf16, #tpu.memory_space<vmem>>, %arg4: memref<1x64xf32, #tpu.memory_space<vmem>>, %arg5: memref<64x128xbf16, #tpu.memory_space<vmem>>, %arg6: memref<1x128xf32, #tpu.memory_space<vmem>>, %arg7: memref<128x1024xbf16, #tpu.memory_space<vmem>>, %arg8: memref<1x1024xf32, #tpu.memory_space<vmem>>, %arg9: memref<1x1x1024xf32, #tpu.memory_space<vmem>>) attributes {dimension_semantics = [#tpu.dimension_semantics<parallel>, #tpu.dimension_semantics<arbitrary>], iteration_bounds = array<i64: 2, 1>, scalar_prefetch = 0 : i64, scratch_operands = 0 : i64, tpu.core_type = #tpu.core_type<tc>, window_params = [{transform_indices = @transform_0, window_bounds = array<i64: 1, 16, 4>}, {pipeline_mode = #tpu.pipeline_mode<synchronous>, transform_indices = @transform_1, window_bounds = array<i64: 1, 4, 64>}, {pipeline_mode = #tpu.pipeline_mode<synchronous>, transform_indices = @transform_2, window_bounds = array<i64: 1, 64>}, {pipeline_mode = #tpu.pipeline_mode<synchronous>, transform_indices = @transform_3, window_bounds = array<i64: 64, 128>}, {pipeline_mode = #tpu.pipeline_mode<synchronous>, transform_indices = @transform_4, window_bounds = array<i64: 1, 128>}, {pipeline_mode = #tpu.pipeline_mode<synchronous>, transform_indices = @transform_5, window_bounds = array<i64: 128, 1024>}, {pipeline_mode = #tpu.pipeline_mode<synchronous>, transform_indices = @transform_6, window_bounds = array<i64: 1, 1024>}, {transform_indices = @transform_7, window_bounds = array<i64: 1, 1, 1024>}]} {
    %c0 = arith.constant 0 : index
    %c0_0 = arith.constant 0 : index
    %c0_1 = arith.constant 0 : index
    %0 = vector.load %arg2[%c0, %c0_0, %c0_1] : memref<1x16x4xbf16, #tpu.memory_space<vmem>>, vector<1x16x4xbf16>
    %1 = vector.shape_cast %0 : vector<1x16x4xbf16> to vector<16x4xbf16>
    %2 = arith.extf %1 : vector<16x4xbf16> to vector<16x4xf32>
    %c0_2 = arith.constant 0 : index
    %c0_3 = arith.constant 0 : index
    %3 = vector.load %arg4[%c0_2, %c0_3] : memref<1x64xf32, #tpu.memory_space<vmem>>, vector<1x64xf32>
    %4 = vector.extract_strided_slice %2 {offsets = [0, 0], sizes = [16, 1], strides = [1, 1]} : vector<16x4xf32> to vector<16x1xf32>
    %c0_4 = arith.constant 0 : index
    %c0_5 = arith.constant 0 : index
    %c0_6 = arith.constant 0 : index
    %5 = vector.load %arg3[%c0_4, %c0_5, %c0_6] : memref<1x4x64xbf16, #tpu.memory_space<vmem>>, vector<1x1x64xbf16>
    %6 = vector.shape_cast %5 : vector<1x1x64xbf16> to vector<1x64xbf16>
    %7 = arith.extf %6 : vector<1x64xbf16> to vector<1x64xf32>
    %8 = vector.broadcast %4 : vector<16x1xf32> to vector<16x64xf32>
    %9 = vector.broadcast %7 : vector<1x64xf32> to vector<16x64xf32>
    %10 = arith.mulf %8, %9 : vector<16x64xf32>
    %11 = vector.broadcast %3 : vector<1x64xf32> to vector<16x64xf32>
    %12 = arith.addf %11, %10 : vector<16x64xf32>
    %13 = vector.extract_strided_slice %2 {offsets = [0, 1], sizes = [16, 1], strides = [1, 1]} : vector<16x4xf32> to vector<16x1xf32>
    %c0_7 = arith.constant 0 : index
    %c1 = arith.constant 1 : index
    %c0_8 = arith.constant 0 : index
    %14 = vector.load %arg3[%c0_7, %c1, %c0_8] : memref<1x4x64xbf16, #tpu.memory_space<vmem>>, vector<1x1x64xbf16>
    %15 = vector.shape_cast %14 : vector<1x1x64xbf16> to vector<1x64xbf16>
    %16 = arith.extf %15 : vector<1x64xbf16> to vector<1x64xf32>
    %17 = vector.broadcast %13 : vector<16x1xf32> to vector<16x64xf32>
    %18 = vector.broadcast %16 : vector<1x64xf32> to vector<16x64xf32>
    %19 = arith.mulf %17, %18 : vector<16x64xf32>
    %20 = arith.addf %12, %19 : vector<16x64xf32>
    %21 = vector.extract_strided_slice %2 {offsets = [0, 2], sizes = [16, 1], strides = [1, 1]} : vector<16x4xf32> to vector<16x1xf32>
    %c0_9 = arith.constant 0 : index
    %c2 = arith.constant 2 : index
    %c0_10 = arith.constant 0 : index
    %22 = vector.load %arg3[%c0_9, %c2, %c0_10] : memref<1x4x64xbf16, #tpu.memory_space<vmem>>, vector<1x1x64xbf16>
    %23 = vector.shape_cast %22 : vector<1x1x64xbf16> to vector<1x64xbf16>
    %24 = arith.extf %23 : vector<1x64xbf16> to vector<1x64xf32>
    %25 = vector.broadcast %21 : vector<16x1xf32> to vector<16x64xf32>
    %26 = vector.broadcast %24 : vector<1x64xf32> to vector<16x64xf32>
    %27 = arith.mulf %25, %26 : vector<16x64xf32>
    %28 = arith.addf %20, %27 : vector<16x64xf32>
    %29 = vector.extract_strided_slice %2 {offsets = [0, 3], sizes = [16, 1], strides = [1, 1]} : vector<16x4xf32> to vector<16x1xf32>
    %c0_11 = arith.constant 0 : index
    %c3 = arith.constant 3 : index
    %c0_12 = arith.constant 0 : index
    %30 = vector.load %arg3[%c0_11, %c3, %c0_12] : memref<1x4x64xbf16, #tpu.memory_space<vmem>>, vector<1x1x64xbf16>
    %31 = vector.shape_cast %30 : vector<1x1x64xbf16> to vector<1x64xbf16>
    %32 = arith.extf %31 : vector<1x64xbf16> to vector<1x64xf32>
    %33 = vector.broadcast %29 : vector<16x1xf32> to vector<16x64xf32>
    %34 = vector.broadcast %32 : vector<1x64xf32> to vector<16x64xf32>
    %35 = arith.mulf %33, %34 : vector<16x64xf32>
    %36 = arith.addf %28, %35 : vector<16x64xf32>
    %cst = arith.constant 0.000000e+00 : f32
    %37 = vector.broadcast %cst : f32 to vector<16x64xf32>
    %38 = arith.maximumf %36, %37 : vector<16x64xf32>
    %39 = arith.truncf %38 : vector<16x64xf32> to vector<16x64xbf16>
    %c0_13 = arith.constant 0 : index
    %c0_14 = arith.constant 0 : index
    %40 = vector.load %arg5[%c0_13, %c0_14] : memref<64x128xbf16, #tpu.memory_space<vmem>>, vector<64x128xbf16>
    %cst_15 = arith.constant dense<0.000000e+00> : vector<16x128xf32>
    %41 = tpu.matmul %39, %40, %cst_15 {dimension_numbers = #tpu.dot_dimension_numbers<[1], [0], [0], [1], [0, 0, 1, 1], [], []>} : vector<16x64xbf16>, vector<64x128xbf16>, vector<16x128xf32> -> vector<16x128xf32>
    %c0_16 = arith.constant 0 : index
    %c0_17 = arith.constant 0 : index
    %42 = vector.load %arg6[%c0_16, %c0_17] : memref<1x128xf32, #tpu.memory_space<vmem>>, vector<1x128xf32>
    %43 = vector.broadcast %42 : vector<1x128xf32> to vector<16x128xf32>
    %44 = arith.addf %41, %43 : vector<16x128xf32>
    %cst_18 = arith.constant 0.000000e+00 : f32
    %45 = vector.broadcast %cst_18 : f32 to vector<16x128xf32>
    %46 = arith.maximumf %44, %45 : vector<16x128xf32>
    %47 = arith.truncf %46 : vector<16x128xf32> to vector<16x128xbf16>
    %c0_19 = arith.constant 0 : index
    %c0_20 = arith.constant 0 : index
    %48 = vector.load %arg7[%c0_19, %c0_20] : memref<128x1024xbf16, #tpu.memory_space<vmem>>, vector<128x1024xbf16>
    %cst_21 = arith.constant dense<0.000000e+00> : vector<16x1024xf32>
    %49 = tpu.matmul %47, %48, %cst_21 {dimension_numbers = #tpu.dot_dimension_numbers<[1], [0], [0], [1], [0, 0, 1, 1], [], []>} : vector<16x128xbf16>, vector<128x1024xbf16>, vector<16x1024xf32> -> vector<16x1024xf32>
    %c0_i32 = arith.constant 0 : i32
    %50 = arith.cmpi eq, %arg1, %c0_i32 : i32
    %51 = arith.extui %50 : i1 to i32
    %c0_i32_22 = arith.constant 0 : i32
    %52 = arith.cmpi ne, %51, %c0_i32_22 : i32
    scf.if %52 {
      %cst_32 = arith.constant 0xFF800000 : f32
      %64 = vector.broadcast %cst_32 : f32 to vector<1x1024xf32>
      %c0_33 = arith.constant 0 : index
      %c0_34 = arith.constant 0 : index
      %c0_35 = arith.constant 0 : index
      %65 = vector.load %arg9[%c0_33, %c0_34, %c0_35] : memref<1x1x1024xf32, #tpu.memory_space<vmem>>, vector<1x1x1024xf32>
      %66 = vector.shape_cast %65 : vector<1x1x1024xf32> to vector<1x1024xf32>
      %67 = vector.shape_cast %64 : vector<1x1024xf32> to vector<1x1x1024xf32>
      tpu.vector_store %arg9[%c0_33, %c0_34, %c0_35], %67 {strides = array<i32>} : memref<1x1x1024xf32, #tpu.memory_space<vmem>>, vector<1x1x1024xf32>,
    } else {
    }
    %c0_23 = arith.constant 0 : index
    %c0_24 = arith.constant 0 : index
    %c0_25 = arith.constant 0 : index
    %53 = vector.load %arg9[%c0_23, %c0_24, %c0_25] : memref<1x1x1024xf32, #tpu.memory_space<vmem>>, vector<1x1x1024xf32>
    %54 = vector.shape_cast %53 : vector<1x1x1024xf32> to vector<1x1024xf32>
    %cst_26 = arith.constant dense<0xFF800000> : vector<1024xf32>
    %55 = vector.multi_reduction <maximumf>, %49, %cst_26 [0] : vector<16x1024xf32> to vector<1024xf32>
    %56 = vector.shape_cast %55 : vector<1024xf32> to vector<1x1024xf32>
    %57 = arith.maximumf %54, %56 : vector<1x1024xf32>
    %c0_27 = arith.constant 0 : index
    %c0_28 = arith.constant 0 : index
    %c0_29 = arith.constant 0 : index
    %58 = vector.load %arg9[%c0_27, %c0_28, %c0_29] : memref<1x1x1024xf32, #tpu.memory_space<vmem>>, vector<1x1x1024xf32>
    %59 = vector.shape_cast %58 : vector<1x1x1024xf32> to vector<1x1024xf32>
    %60 = vector.shape_cast %57 : vector<1x1024xf32> to vector<1x1x1024xf32>
    tpu.vector_store %arg9[%c0_27, %c0_28, %c0_29], %60 {strides = array<i32>} : memref<1x1x1024xf32, #tpu.memory_space<vmem>>, vector<1x1x1024xf32>,
    %c0_i32_30 = arith.constant 0 : i32
    %61 = arith.cmpi eq, %arg1, %c0_i32_30 : i32
    %62 = arith.extui %61 : i1 to i32
    %c0_i32_31 = arith.constant 0 : i32
    %63 = arith.cmpi ne, %62, %c0_i32_31 : i32
    scf.if %63 {
      %c0_32 = arith.constant 0 : index
      %c0_33 = arith.constant 0 : index
      %c0_34 = arith.constant 0 : index
      %64 = vector.load %arg9[%c0_32, %c0_33, %c0_34] : memref<1x1x1024xf32, #tpu.memory_space<vmem>>, vector<1x1x1024xf32>
      %65 = vector.shape_cast %64 : vector<1x1x1024xf32> to vector<1x1024xf32>
      %c0_35 = arith.constant 0 : index
      %c0_36 = arith.constant 0 : index
      %66 = vector.load %arg8[%c0_35, %c0_36] : memref<1x1024xf32, #tpu.memory_space<vmem>>, vector<1x1024xf32>
      %67 = arith.addf %65, %66 : vector<1x1024xf32>
      %cst_37 = arith.constant 0.000000e+00 : f32
      %68 = vector.broadcast %cst_37 : f32 to vector<1x1024xf32>
      %69 = arith.maximumf %67, %68 : vector<1x1024xf32>
      %c0_38 = arith.constant 0 : index
      %c0_39 = arith.constant 0 : index
      %c0_40 = arith.constant 0 : index
      %70 = vector.load %arg9[%c0_38, %c0_39, %c0_40] : memref<1x1x1024xf32, #tpu.memory_space<vmem>>, vector<1x1x1024xf32>
      %71 = vector.shape_cast %70 : vector<1x1x1024xf32> to vector<1x1024xf32>
      %72 = vector.shape_cast %69 : vector<1x1024xf32> to vector<1x1x1024xf32>
      tpu.vector_store %arg9[%c0_38, %c0_39, %c0_40], %72 {strides = array<i32>} : memref<1x1x1024xf32, #tpu.memory_space<vmem>>, vector<1x1x1024xf32>,
    } else {
    }
    return
  }
  func.func @transform_0(%arg0: i32, %arg1: i32) -> (i32, i32, i32) {
    %c0_i32 = arith.constant 0 : i32
    %c0_i32_0 = arith.constant 0 : i32
    return %arg0, %arg1, %c0_i32 : i32, i32, i32
  }
  func.func @transform_1(%arg0: i32, %arg1: i32) -> (i32, i32, i32) {
    %c0_i32 = arith.constant 0 : i32
    %c0_i32_0 = arith.constant 0 : i32
    %c0_i32_1 = arith.constant 0 : i32
    %c0_i32_2 = arith.constant 0 : i32
    return %c0_i32, %c0_i32_0, %c0_i32_1 : i32, i32, i32
  }
  func.func @transform_2(%arg0: i32, %arg1: i32) -> (i32, i32) {
    %c0_i32 = arith.constant 0 : i32
    %c0_i32_0 = arith.constant 0 : i32
    %c0_i32_1 = arith.constant 0 : i32
    return %c0_i32, %c0_i32_0 : i32, i32
  }
  func.func @transform_3(%arg0: i32, %arg1: i32) -> (i32, i32) {
    %c0_i32 = arith.constant 0 : i32
    %c0_i32_0 = arith.constant 0 : i32
    %c0_i32_1 = arith.constant 0 : i32
    return %c0_i32, %c0_i32_0 : i32, i32
  }
  func.func @transform_4(%arg0: i32, %arg1: i32) -> (i32, i32) {
    %c0_i32 = arith.constant 0 : i32
    %c0_i32_0 = arith.constant 0 : i32
    %c0_i32_1 = arith.constant 0 : i32
    return %c0_i32, %c0_i32_0 : i32, i32
  }
  func.func @transform_5(%arg0: i32, %arg1: i32) -> (i32, i32) {
    %c0_i32 = arith.constant 0 : i32
    %c0_i32_0 = arith.constant 0 : i32
    %c0_i32_1 = arith.constant 0 : i32
    return %c0_i32, %c0_i32_0 : i32, i32
  }
  func.func @transform_6(%arg0: i32, %arg1: i32) -> (i32, i32) {
    %c0_i32 = arith.constant 0 : i32
    %c0_i32_0 = arith.constant 0 : i32
    %c0_i32_1 = arith.constant 0 : i32
    return %c0_i32, %c0_i32_0 : i32, i32
  }
  func.func @transform_7(%arg0: i32, %arg1: i32) -> (i32, i32, i32) {
    %c0_i32 = arith.constant 0 : i32
    %c0_i32_0 = arith.constant 0 : i32
    %c0_i32_1 = arith.constant 0 : i32
    return %arg0, %c0_i32, %c0_i32_0 : i32, i32, i32
  }
}

</mosaic_0001>

<llo_original>
// kernel: tpu_custom_call.1
$region0: #{tpu_custom_call.1}
  #allocation0 [shape = 'u32[]', space=smem, size = 0x4, offset = 0x4, fixed_abs, tag = 'smem constant byte address 0x4 - core index']
  #allocation1 [shape = 'u32[72,128]{1,0:T(1,128)}', space=vmem, size = 0x9000, scoped, tag = 'internal scratch']
  %s0 = inlined_call_operand.vmem [shape: bf16[2,16,4], index: 0, kind: input, shape index: {}]
  %s1 = inlined_call_operand.vmem [shape: bf16[1,4,64], index: 1, kind: input, shape index: {}]
  %s2 = inlined_call_operand.vmem [shape: f32[1,64], index: 2, kind: input, shape index: {}]
  %s3 = inlined_call_operand.hbm [shape: bf16[64,128], index: 3, kind: input, shape index: {}]
  %s4 = inlined_call_operand.vmem [shape: f32[1,128], index: 4, kind: input, shape index: {}]
  %s5 = inlined_call_operand.hbm [shape: bf16[128,1024], index: 5, kind: input, shape index: {}]
  %s6 = inlined_call_operand.vmem [shape: f32[1,1024], index: 6, kind: input, shape index: {}]
  %s7 = inlined_call_operand.hbm [shape: f32[2,1,1024], index: 7, kind: output, shape index: {}]
  %s8 = sld [smem:[#allocation0]]
  $region77: #{tpu_custom_call.1} parent=0
    _
  %s10 = ssub.s32 1, %s8
  %s11 = scalar_select 0, %s10, %s8
  $region1: #{tpu_custom_call.1} parent=0
    #allocation2 [shape = 'u8[16384]{0}', space=vmem, size = 0x4000, scoped, tag = 'input window, operand 3, single buffered']
    #allocation3 [shape = 's32[2]{0}', space=sflag, size = 0x8, scoped, tag = 'scoped memory for tpu_custom_call.1']
    #allocation4 [shape = 's32[2]{0}', space=sflag, size = 0x8, scoped, tag = 'scoped memory for tpu_custom_call.1']
    #allocation5 [shape = 'u8[262144]{0}', space=vmem, size = 0x40000, scoped, tag = 'input window, operand 5, single buffered']
    #allocation6 [shape = 's32[1]{0}', space=sflag, size = 0x4, scoped, tag = 'scoped memory for tpu_custom_call.1']
    #allocation7 [shape = 'u8[8192]{0}', space=vmem, size = 0x2000, scoped, tag = 'output window, operand 0']
    %12 = vsyncpa [#allocation3], 0
    %13 = vsyncpa [#allocation6], 0
    %14 = vsyncpa [#allocation4], 0
    %s15 = scalar_lea.sflag [#allocation4], 1
    %16 = vsyncpa %s15, 0
    loop: start=0, step=1, limit=4
    $region2: #{tpu_custom_call.1} parent=1 // loop_pre_header
      _
    $region3: #{tpu_custom_call.1} parent=1 // loop_header
      %s18 = sphi 0, %s22
      %p19 = scmp.ge.s32.totalorder %s18, 4
      %s25 = sphi 0, %s37
      %s26 = sphi 0, %s33
      %s27 = sphi 0, %s25
      %s28 = sphi 0, %s26
      %s29 = sphi 0, %s27
      %s30 = sphi 0, %s28
      %s42 = sphi 0, %s44
      %s45 = sphi 0, %s42
      %s46 = sphi 0, %s45
      %s62 = sphi 0, %s46
      %s66 = sphi 0, %s66
      %s68 = sphi 0, %s66
      %s69 = sphi 0, %s68
      %s83 = sphi 0, %s69
      %s87 = sphi 0, %s87
      %s89 = sphi 0, %s87
      %s90 = sphi 0, %s89
      %s104 = sphi 0, %s90
      %s108 = sphi 0, %s108
      %s110 = sphi 0, %s108
      %s111 = sphi 0, %s110
      %s125 = sphi 0, %s111
      %s129 = sphi 0, %s129
      %s131 = sphi 0, %s129
      %s132 = sphi 0, %s131
      %s146 = sphi 0, %s132
      %s150 = sphi 0, %s150
      %s152 = sphi 0, %s150
      %s153 = sphi 0, %s152
      %s167 = sphi 0, %s153
      %s171 = sphi 0, %s171
      %s173 = sphi 0, %s171
      %s174 = sphi 0, %s173
      %s188 = sphi 0, %s174
      %s194 = sphi 0, %s196
      %s197 = sphi 0, %s194
      %s198 = sphi 0, %s197
      %s214 = sphi 0, %s198
    $region4: #{tpu_custom_call.1} parent=1 // loop_header_branch
      %21 = sbr.rel (%p19) target = $region8
    $region5: #{tpu_custom_call.1} parent=1 // loop_body
      %s23 = ssub.s32 %s18, 1
      %s24 = ssub.s32 %s18, 2
      %s31 = sadd.s32 1, %s26
      %p32 = scmp.ge.s32.totalorder %s31, 1
      %s33 = scalar_select %p32, 0, %s31
      %s34 = sadd.s32 1, %s25
      %s35 = scalar_select %p32, %s34, %s25
      %p36 = scmp.ge.s32.totalorder %s35, 2
      %s37 = scalar_select %p36, 0, %s35
      %s38 = ssub.s32 %s25, %s37
      %s39 = ssub.s32 %s26, %s33
      %s40 = sor.u32 %s38, %s39
      %p41 = scmp.eq.s32.totalorder %s40, 0
      %s43 = sadd.s32 %s42, 1
      %s44 = scalar_select %p41, %s42, %s43
      %p47 = pneg %p41
      %p48 = scmp.eq.s32.totalorder %s18, 1
      %p49 = por %p47, %p48
      %p50 = scmp.ne.s32.totalorder %s42, %s45
      %p51 = scmp.eq.s32.totalorder %s18, 0
      %p52 = por %p50, %p51
      %p53 = scmp.ne.s32.totalorder %s42, %s45
      %p54 = scmp.eq.s32.totalorder %s23, 1
      %p55 = por %p53, %p54
      %p56 = scmp.ne.s32.totalorder %s45, %s46
      %p57 = scmp.eq.s32.totalorder %s23, 0
      %p58 = por %p56, %p57
      %p59 = scmp.ne.s32.totalorder %s45, %s46
      %p60 = scmp.eq.s32.totalorder %s24, 1
      %p61 = por %p59, %p60
      %p63 = scmp.ne.s32.totalorder %s46, %s62
      %p64 = scmp.eq.s32.totalorder %s24, 0
      %p65 = por %p63, %p64
      %s67 = sadd.s32 %s66, 1
      %p70 = scmp.eq.s32.totalorder %s18, 1
      %p71 = scmp.ne.s32.totalorder %s66, %s68
      %p72 = scmp.eq.s32.totalorder %s18, 0
      %p73 = por %p71, %p72
      %p74 = scmp.ne.s32.totalorder %s66, %s68
      %p75 = scmp.eq.s32.totalorder %s23, 1
      %p76 = por %p74, %p75
      %p77 = scmp.ne.s32.totalorder %s68, %s69
      %p78 = scmp.eq.s32.totalorder %s23, 0
      %p79 = por %p77, %p78
      %p80 = scmp.ne.s32.totalorder %s68, %s69
      %p81 = scmp.eq.s32.totalorder %s24, 1
      %p82 = por %p80, %p81
      %p84 = scmp.ne.s32.totalorder %s69, %s83
      %p85 = scmp.eq.s32.totalorder %s24, 0
      %p86 = por %p84, %p85
      %s88 = sadd.s32 %s87, 1
      %p91 = scmp.eq.s32.totalorder %s18, 1
      %p92 = scmp.ne.s32.totalorder %s87, %s89
      %p93 = scmp.eq.s32.totalorder %s18, 0
      %p94 = por %p92, %p93
      %p95 = scmp.ne.s32.totalorder %s87, %s89
      %p96 = scmp.eq.s32.totalorder %s23, 1
      %p97 = por %p95, %p96
      %p98 = scmp.ne.s32.totalorder %s89, %s90
      %p99 = scmp.eq.s32.totalorder %s23, 0
      %p100 = por %p98, %p99
      %p101 = scmp.ne.s32.totalorder %s89, %s90
      %p102 = scmp.eq.s32.totalorder %s24, 1
      %p103 = por %p101, %p102
      %p105 = scmp.ne.s32.totalorder %s90, %s104
      %p106 = scmp.eq.s32.totalorder %s24, 0
      %p107 = por %p105, %p106
      %s109 = sadd.s32 %s108, 1
      %p112 = scmp.eq.s32.totalorder %s18, 1
      %p113 = scmp.ne.s32.totalorder %s108, %s110
      %p114 = scmp.eq.s32.totalorder %s18, 0
      %p115 = por %p113, %p114
      %p116 = scmp.ne.s32.totalorder %s108, %s110
      %p117 = scmp.eq.s32.totalorder %s23, 1
      %p118 = por %p116, %p117
      %p119 = scmp.ne.s32.totalorder %s110, %s111
      %p120 = scmp.eq.s32.totalorder %s23, 0
      %p121 = por %p119, %p120
      %p122 = scmp.ne.s32.totalorder %s110, %s111
      %p123 = scmp.eq.s32.totalorder %s24, 1
      %p124 = por %p122, %p123
      %p126 = scmp.ne.s32.totalorder %s111, %s125
      %p127 = scmp.eq.s32.totalorder %s24, 0
      %p128 = por %p126, %p127
      %s130 = sadd.s32 %s129, 1
      %p133 = scmp.eq.s32.totalorder %s18, 1
      %p134 = scmp.ne.s32.totalorder %s129, %s131
      %p135 = scmp.eq.s32.totalorder %s18, 0
      %p136 = por %p134, %p135
      %p137 = scmp.ne.s32.totalorder %s129, %s131
      %p138 = scmp.eq.s32.totalorder %s23, 1
      %p139 = por %p137, %p138
      %p140 = scmp.ne.s32.totalorder %s131, %s132
      %p141 = scmp.eq.s32.totalorder %s23, 0
      %p142 = por %p140, %p141
      %p143 = scmp.ne.s32.totalorder %s131, %s132
      %p144 = scmp.eq.s32.totalorder %s24, 1
      %p145 = por %p143, %p144
      %p147 = scmp.ne.s32.totalorder %s132, %s146
      %p148 = scmp.eq.s32.totalorder %s24, 0
      %p149 = por %p147, %p148
      %s151 = sadd.s32 %s150, 1
      %p154 = scmp.eq.s32.totalorder %s18, 1
      %p155 = scmp.ne.s32.totalorder %s150, %s152
      %p156 = scmp.eq.s32.totalorder %s18, 0
      %p157 = por %p155, %p156
      %p158 = scmp.ne.s32.totalorder %s150, %s152
      %p159 = scmp.eq.s32.totalorder %s23, 1
      %p160 = por %p158, %p159
      %p161 = scmp.ne.s32.totalorder %s152, %s153
      %p162 = scmp.eq.s32.totalorder %s23, 0
      %p163 = por %p161, %p162
      %p164 = scmp.ne.s32.totalorder %s152, %s153
      %p165 = scmp.eq.s32.totalorder %s24, 1
      %p166 = por %p164, %p165
      %p168 = scmp.ne.s32.totalorder %s153, %s167
      %p169 = scmp.eq.s32.totalorder %s24, 0
      %p170 = por %p168, %p169
      %s172 = sadd.s32 %s171, 1
      %p175 = scmp.eq.s32.totalorder %s18, 1
      %p176 = scmp.ne.s32.totalorder %s171, %s173
      %p177 = scmp.eq.s32.totalorder %s18, 0
      %p178 = por %p176, %p177
      %p179 = scmp.ne.s32.totalorder %s171, %s173
      %p180 = scmp.eq.s32.totalorder %s23, 1
      %p181 = por %p179, %p180
      %p182 = scmp.ne.s32.totalorder %s173, %s174
      %p183 = scmp.eq.s32.totalorder %s23, 0
      %p184 = por %p182, %p183
      %p185 = scmp.ne.s32.totalorder %s173, %s174
      %p186 = scmp.eq.s32.totalorder %s24, 1
      %p187 = por %p185, %p186
      %p189 = scmp.ne.s32.totalorder %s174, %s188
      %p190 = scmp.eq.s32.totalorder %s24, 0
      %p191 = por %p189, %p190
      %s192 = ssub.s32 %s25, %s37
      %p193 = scmp.eq.s32.totalorder %s192, 0
      %s195 = sadd.s32 %s194, 1
      %s196 = scalar_select %p193, %s194, %s195
      %p199 = pneg %p193
      %p200 = scmp.eq.s32.totalorder %s18, 1
      %p201 = por %p199, %p200
      %p202 = scmp.ne.s32.totalorder %s194, %s197
      %p203 = scmp.eq.s32.totalorder %s18, 0
      %p204 = por %p202, %p203
      %p205 = scmp.ne.s32.totalorder %s194, %s197
      %p206 = scmp.eq.s32.totalorder %s23, 1
      %p207 = por %p205, %p206
      %p208 = scmp.ne.s32.totalorder %s197, %s198
      %p209 = scmp.eq.s32.totalorder %s23, 0
      %p210 = por %p208, %p209
      %p211 = scmp.ne.s32.totalorder %s197, %s198
      %p212 = scmp.eq.s32.totalorder %s24, 1
      %p213 = por %p211, %p212
      %p215 = scmp.ne.s32.totalorder %s198, %s214
      %p216 = scmp.eq.s32.totalorder %s24, 0
      %p217 = por %p215, %p216
      %p218 = scmp.le.s32.totalorder 1, %s18
      %p219 = scmp.lt.s32.totalorder %s18, 3
      %p220 = pnand %p218, %p219
      %p221 = pneg %p220
      // Predicated region
      $region9: #{tpu_custom_call.1} parent=5 // pred_check
        _
      $region10: #{tpu_custom_call.1} parent=5 // pred_check_branch
        %223 = sbr.rel (%p220) target = $region12
      $region11: #{tpu_custom_call.1} parent=5 // pred_region
        %s224 = ssub.s32 %s18, 1
        // Predicated region
        $region13: #{tpu_custom_call.1} parent=11 // pred_check
          %p225 = pneg %p79
        $region14: #{tpu_custom_call.1} parent=11 // pred_check_branch
          %227 = sbr.rel (%p225) target = $region16
        $region15: #{tpu_custom_call.1} parent=11 // pred_region
          _
        $region16: #{tpu_custom_call.1} parent=11 // pred_fallthru
          _
        // Predicated region
        $region17: #{tpu_custom_call.1} parent=11 // pred_check
          %p228 = pneg %p100
        $region18: #{tpu_custom_call.1} parent=11 // pred_check_branch
          %230 = sbr.rel (%p228) target = $region20
        $region19: #{tpu_custom_call.1} parent=11 // pred_region
          _
        $region20: #{tpu_custom_call.1} parent=11 // pred_fallthru
          _
        // Predicated region
        $region21: #{tpu_custom_call.1} parent=11 // pred_check
          %p231 = pneg %p121
        $region22: #{tpu_custom_call.1} parent=11 // pred_check_branch
          %233 = sbr.rel (%p231) target = $region24
        $region23: #{tpu_custom_call.1} parent=11 // pred_region
          %235 = vsyncadd [#allocation3], 0
          %s236 = sshll.u32 %s3, 4
          %s237 = int_to_ptr.hbm [resolvable:$true] %s236
          %s238 = sshll.u32 [#allocation2], 4
          %s239 = int_to_ptr.vmem [resolvable:$true] %s238
          %244 = dma.hbm_to_vmem [thread:$0]  %s237, 512, %s239, [#allocation3], 64, 64, 4
        $region24: #{tpu_custom_call.1} parent=11 // pred_fallthru
          _
        // Predicated region
        $region25: #{tpu_custom_call.1} parent=11 // pred_check
          %p245 = pneg %p142
        $region26: #{tpu_custom_call.1} parent=11 // pred_check_branch
          %247 = sbr.rel (%p245) target = $region28
        $region27: #{tpu_custom_call.1} parent=11 // pred_region
          _
        $region28: #{tpu_custom_call.1} parent=11 // pred_fallthru
          _
        // Predicated region
        $region29: #{tpu_custom_call.1} parent=11 // pred_check
          %p248 = pneg %p163
        $region30: #{tpu_custom_call.1} parent=11 // pred_check_branch
          %250 = sbr.rel (%p248) target = $region32
        $region31: #{tpu_custom_call.1} parent=11 // pred_region
          %252 = vsyncadd [#allocation6], 0
          %s253 = sshll.u32 %s5, 4
          %s254 = int_to_ptr.hbm [resolvable:$true] %s253
          %s255 = sshll.u32 [#allocation5], 4
          %s256 = int_to_ptr.vmem [resolvable:$true] %s255
          %261 = dma.hbm_to_vmem [thread:$0]  %s254, 8192, %s256, [#allocation6], 512, 512, 32
        $region32: #{tpu_custom_call.1} parent=11 // pred_fallthru
          _
        // Predicated region
        $region33: #{tpu_custom_call.1} parent=11 // pred_check
          %p262 = pneg %p184
        $region34: #{tpu_custom_call.1} parent=11 // pred_check_branch
          %264 = sbr.rel (%p262) target = $region36
        $region35: #{tpu_custom_call.1} parent=11 // pred_region
          _
        $region36: #{tpu_custom_call.1} parent=11 // pred_fallthru
          _
      $region12: #{tpu_custom_call.1} parent=5 // pred_fallthru
        _
      %p265 = scmp.lt.s32.totalorder %s18, 2
      // Predicated region
      $region37: #{tpu_custom_call.1} parent=5 // pred_check
        %p266 = pneg %p265
      $region38: #{tpu_custom_call.1} parent=5 // pred_check_branch
        %268 = sbr.rel (%p266) target = $region40
      $region39: #{tpu_custom_call.1} parent=5 // pred_region
        // Predicated region
        $region41: #{tpu_custom_call.1} parent=39 // pred_check
          %p269 = pneg %p52
        $region42: #{tpu_custom_call.1} parent=39 // pred_check_branch
          %271 = sbr.rel (%p269) target = $region44
        $region43: #{tpu_custom_call.1} parent=39 // pred_region
          %s272 = smul.u32 2, %s26
          %p273 = scmp.lt.s32.totalorder %s25, 1
          %s274 = scalar_select %p273, %s25, 1
          %p275 = scmp.lt.s32.totalorder %s272, 1
          %s276 = scalar_select %p275, %s272, 1
          %s277 = smul.addr %s274, 2
          %s278 = sadd.s32 %s276, %s277
          %s279 = smul.addr %s278, 4
          %s280 = scalar_lea.vmem %s0, %s279
          %s281 = smul.u32 2, %s26
        $region44: #{tpu_custom_call.1} parent=39 // pred_fallthru
          _
      $region40: #{tpu_custom_call.1} parent=5 // pred_fallthru
        _
      %p282 = scmp.le.s32.totalorder 1, %s18
      %p283 = scmp.lt.s32.totalorder %s18, 3
      %p284 = pnand %p282, %p283
      %p285 = pneg %p284
      // Predicated region
      $region45: #{tpu_custom_call.1} parent=5 // pred_check
        _
      $region46: #{tpu_custom_call.1} parent=5 // pred_check_branch
        %287 = sbr.rel (%p284) target = $region48
      $region47: #{tpu_custom_call.1} parent=5 // pred_region
        %s288 = ssub.s32 %s18, 1
        // Predicated region
        $region49: #{tpu_custom_call.1} parent=47 // pred_check
          %p289 = pneg %p121
        $region50: #{tpu_custom_call.1} parent=47 // pred_check_branch
          %291 = sbr.rel (%p289) target = $region52
        $region51: #{tpu_custom_call.1} parent=47 // pred_region
          %293 = dma.done [#allocation3], 512
        $region52: #{tpu_custom_call.1} parent=47 // pred_fallthru
          _
        // Predicated region
        $region53: #{tpu_custom_call.1} parent=47 // pred_check
          %p294 = pneg %p163
        $region54: #{tpu_custom_call.1} parent=47 // pred_check_branch
          %296 = sbr.rel (%p294) target = $region56
        $region55: #{tpu_custom_call.1} parent=47 // pred_region
          %298 = dma.done [#allocation6], 8192
        $region56: #{tpu_custom_call.1} parent=47 // pred_fallthru
          _
        %s299 = smul.u32 2, %s28
        %p300 = scmp.lt.s32.totalorder %s27, 1
        %s301 = scalar_select %p300, %s27, 1
        %p302 = scmp.lt.s32.totalorder %s299, 1
        %s303 = scalar_select %p302, %s299, 1
        %s304 = smul.addr %s301, 2
        %s305 = sadd.s32 %s303, %s304
        %s306 = smul.addr %s305, 4
        %s307 = scalar_lea.vmem %s0, %s306
        %p308 = pneg %p58
        %p309 = pneg %p55
        %p310 = pneg %p79
        %p311 = pneg %p76
        %p312 = pneg %p100
        %p313 = pneg %p97
        %p314 = pneg %p121
        %p315 = pneg %p118
        %p316 = pneg %p142
        %p317 = pneg %p139
        %p318 = pneg %p163
        %p319 = pneg %p160
        %p320 = pneg %p184
        %p321 = pneg %p181
        %p322 = pneg %p210
        %p323 = pneg %p207
        %s324 = sand.u32 %s197, 1
        %s325 = scalar_lea.sflag [#allocation4], %s324
        %s326 = sand.u32 %s197, 1
        %s327 = smul.addr %s326, 8
        %s328 = scalar_lea.vmem [#allocation7], %s327
        %s329 = smul.u32 2, %s28
        %p330 = scmp.lt.s32.totalorder %s27, 1
        %s331 = scalar_select %p330, %s27, 1
        %p332 = scmp.lt.s32.totalorder %s329, 1
        %s333 = scalar_select %p332, %s329, 1
        %s334 = smul.addr %s331, 2
        %s335 = sadd.s32 %s333, %s334
        %s336 = smul.addr %s335, 4
        %s337 = scalar_lea.vmem %s0, %s336
        %s338 = smul.u32 2, %s28
        %v340 = vld [vmem:[%s337] sm:$0xf]
        %v341 = vld [vmem:[%s337 + $0x4] sm:$0xf]
        %v342 = vunpack.c.l.bf16 %v340
        %v343 = vunpack.c.l.bf16 %v341
        %v344 = vld [vmem:[%s2] sm:$0x1]
        %v345 = vld [vmem:[%s1] sm:$0x1]
        %v346 = vunpack.c.l.bf16 %v345
        %348 = vset.pattern.permute.xlu0 0
        %349 = vperm.xlu0 %348, %v342
        %v350 = vpop.permute.xlu0 %349
        %353 = vset.pattern.permute.xlu0 0
        %354 = vperm.xlu0 %353, %v343
        %v355 = vpop.permute.xlu0 %354
        %v357 = vperm.slane %v346, 0
        %v358 = vmul.f32 %v350, %v357
        %v359 = vmul.f32 %v355, %v357
        %v361 = vperm.slane %v344, 0
        %v363 = vadd.f32 %v361, %v358
        %v364 = vadd.f32 %v361, %v359
        %365 = vset.pattern.permute.xlu0 1
        %366 = vperm.xlu0 %365, %v342
        %v367 = vpop.permute.xlu0 %366
        %369 = vset.pattern.permute.xlu0 1
        %370 = vperm.xlu0 %369, %v343
        %v371 = vpop.permute.xlu0 %370
        %v373 = vperm.slane %v346, 1
        %v374 = vmul.f32 %v367, %v373
        %v375 = vmul.f32 %v371, %v373
        %v376 = vadd.f32 %v363, %v374
        %v377 = vadd.f32 %v364, %v375
        %v378 = vld [vmem:[%s1] sm:$0x2]
        %v379 = vunpack.c.l.bf16 %v378
        %380 = vset.pattern.permute.xlu0 2
        %381 = vperm.xlu0 %380, %v342
        %v382 = vpop.permute.xlu0 %381
        %384 = vset.pattern.permute.xlu0 2
        %385 = vperm.xlu0 %384, %v343
        %v386 = vpop.permute.xlu0 %385
        %v388 = vperm.slane %v379, 2
        %v389 = vmul.f32 %v382, %v388
        %v390 = vmul.f32 %v386, %v388
        %v391 = vadd.f32 %v376, %v389
        %v392 = vadd.f32 %v377, %v390
        %393 = vset.pattern.permute.xlu0 3
        %394 = vperm.xlu0 %393, %v342
        %v395 = vpop.permute.xlu0 %394
        %397 = vset.pattern.permute.xlu0 3
        %398 = vperm.xlu0 %397, %v343
        %v399 = vpop.permute.xlu0 %398
        %v401 = vperm.slane %v379, 3
        %v402 = vmul.f32 %v395, %v401
        %v403 = vmul.f32 %v399, %v401
        %v404 = vadd.f32 %v391, %v402
        %v405 = vadd.f32 %v392, %v403
        %v406 = vmax.f32 %v404, 0.0
        %v407 = vmax.f32 %v405, 0.0
        %v408 = vpack.c.bf16 %v407, %v406
        %v409 = vld [vmem:[#allocation2] sm:$0xf]
        %v410 = vld [vmem:[#allocation2 + $0x4] sm:$0xf]
        %v411 = vld [vmem:[#allocation2 + $0x8] sm:$0xf]
        %v412 = vld [vmem:[#allocation2 + $0xc] sm:$0xf]
        %v413 = vld [vmem:[#allocation2 + $0x10] sm:$0xf]
        %v414 = vld [vmem:[#allocation2 + $0x14] sm:$0xf]
        %v415 = vld [vmem:[#allocation2 + $0x18] sm:$0xf]
        %v416 = vld [vmem:[#allocation2 + $0x1c] sm:$0xf]
        %v417 = vld [vmem:[%s4] sm:$0x1]
        %v419 = vperm.slane %v417, 0
        %v429 = vunpack.c.l.b16 %v409
        %v430 = vunpack.c.l.b16 %v410
        %v431 = vunpack.c.l.b16 %v411
        %v432 = vunpack.c.l.b16 %v412
        %v433 = vunpack.c.l.b16 %v413
        %v434 = vunpack.c.l.b16 %v414
        %v435 = vunpack.c.l.b16 %v415
        %v436 = vunpack.c.l.b16 %v416
        %v437 = vpack.c.b16 %v430, %v429
        %v438 = vpack.c.b16 %v432, %v431
        %v439 = vpack.c.b16 %v434, %v433
        %v440 = vpack.c.b16 %v436, %v435
        %vm445 = vcmask 523264
        %v447 = vsel %vm445, %v408, 0
        %449 = vmatpush.bf16.msra.mxu0 0
        %450 = vmatpush.bf16.msra.mxu0 0
        %451 = vmatpush.bf16.msra.mxu0 0
        %452 = vmatpush.bf16.msra.mxu0 0
        %453 = vmatpush.bf16.msra.mxu0 %v440
        %454 = vmatpush.bf16.msra.mxu0 %v439
        %455 = vmatpush.bf16.msra.mxu0 %v438
        %456 = vmatpush.bf16.msra.mxu0 %v437
        %457 = vmatmul.bf16.gmra.mxu0 %v447
        %v458 = vpop.f32.mrf.mxu0
        %v459 = vadd.f32 %v419, %v458
        %v460 = vpop.f32.mrf.mxu0
        %v461 = vadd.f32 %v419, %v460
        %462 = vdwg.mxu0
        %v463 = vmax.f32 %v459, 0.0
        %v464 = vmax.f32 %v461, 0.0
        %v465 = vpack.c.bf16 %v464, %v463
        %v466 = vld [vmem:[#allocation5] sm:$0xff]
        %v467 = vld [vmem:[#allocation5 + $0x8] sm:$0xff]
        %v468 = vld [vmem:[#allocation5 + $0x10] sm:$0xff]
        %v469 = vld [vmem:[#allocation5 + $0x18] sm:$0xff]
        %v470 = vld [vmem:[#allocation5 + $0x20] sm:$0xff]
        %v471 = vld [vmem:[#allocation5 + $0x28] sm:$0xff]
        %v472 = vld [vmem:[#allocation5 + $0x30] sm:$0xff]
        %v473 = vld [vmem:[#allocation5 + $0x38] sm:$0xff]
        %v474 = vld [vmem:[#allocation5 + $0x40] sm:$0xff]
        %v475 = vld [vmem:[#allocation5 + $0x48] sm:$0xff]
        %v476 = vld [vmem:[#allocation5 + $0x50] sm:$0xff]
        %v477 = vld [vmem:[#allocation5 + $0x58] sm:$0xff]
        %v478 = vld [vmem:[#allocation5 + $0x60] sm:$0xff]
        %v479 = vld [vmem:[#allocation5 + $0x68] sm:$0xff]
        %v480 = vld [vmem:[#allocation5 + $0x70] sm:$0xff]
        %v481 = vld [vmem:[#allocation5 + $0x78] sm:$0xff]
        %v482 = vld [vmem:[#allocation5 + $0x80] sm:$0xff]
        %v483 = vld [vmem:[#allocation5 + $0x88] sm:$0xff]
        %v484 = vld [vmem:[#allocation5 + $0x90] sm:$0xff]
        %v485 = vld [vmem:[#allocation5 + $0x98] sm:$0xff]
        %v486 = vld [vmem:[#allocation5 + $0xa0] sm:$0xff]
        %v487 = vld [vmem:[#allocation5 + $0xa8] sm:$0xff]
        %v488 = vld [vmem:[#allocation5 + $0xb0] sm:$0xff]
        %v489 = vld [vmem:[#allocation5 + $0xb8] sm:$0xff]
        %v490 = vld [vmem:[#allocation5 + $0xc0] sm:$0xff]
        %v491 = vld [vmem:[#allocation5 + $0xc8] sm:$0xff]
        %v492 = vld [vmem:[#allocation5 + $0xd0] sm:$0xff]
        %v493 = vld [vmem:[#allocation5 + $0xd8] sm:$0xff]
        %v494 = vld [vmem:[#allocation5 + $0xe0] sm:$0xff]
        %v495 = vld [vmem:[#allocation5 + $0xe8] sm:$0xff]
        %v496 = vld [vmem:[#allocation5 + $0xf0] sm:$0xff]
        %v497 = vld [vmem:[#allocation5 + $0xf8] sm:$0xff]
        %v498 = vld [vmem:[#allocation5 + $0x100] sm:$0xff]
        %v499 = vld [vmem:[#allocation5 + $0x108] sm:$0xff]
        %v500 = vld [vmem:[#allocation5 + $0x110] sm:$0xff]
        %v501 = vld [vmem:[#allocation5 + $0x118] sm:$0xff]
        %v502 = vld [vmem:[#allocation5 + $0x120] sm:$0xff]
        %v503 = vld [vmem:[#allocation5 + $0x128] sm:$0xff]
        %v504 = vld [vmem:[#allocation5 + $0x130] sm:$0xff]
        %v505 = vld [vmem:[#allocation5 + $0x138] sm:$0xff]
        %v506 = vld [vmem:[#allocation5 + $0x140] sm:$0xff]
        %v507 = vld [vmem:[#allocation5 + $0x148] sm:$0xff]
        %v508 = vld [vmem:[#allocation5 + $0x150] sm:$0xff]
        %v509 = vld [vmem:[#allocation5 + $0x158] sm:$0xff]
        %v510 = vld [vmem:[#allocation5 + $0x160] sm:$0xff]
        %v511 = vld [vmem:[#allocation5 + $0x168] sm:$0xff]
        %v512 = vld [vmem:[#allocation5 + $0x170] sm:$0xff]
        %v513 = vld [vmem:[#allocation5 + $0x178] sm:$0xff]
        %v514 = vld [vmem:[#allocation5 + $0x180] sm:$0xff]
        %v515 = vld [vmem:[#allocation5 + $0x188] sm:$0xff]
        %v516 = vld [vmem:[#allocation5 + $0x190] sm:$0xff]
        %v517 = vld [vmem:[#allocation5 + $0x198] sm:$0xff]
        %v518 = vld [vmem:[#allocation5 + $0x1a0] sm:$0xff]
        %v519 = vld [vmem:[#allocation5 + $0x1a8] sm:$0xff]
        %v520 = vld [vmem:[#allocation5 + $0x1b0] sm:$0xff]
        %v521 = vld [vmem:[#allocation5 + $0x1b8] sm:$0xff]
        %v522 = vld [vmem:[#allocation5 + $0x1c0] sm:$0xff]
        %v523 = vld [vmem:[#allocation5 + $0x1c8] sm:$0xff]
        %v524 = vld [vmem:[#allocation5 + $0x1d0] sm:$0xff]
        %v525 = vld [vmem:[#allocation5 + $0x1d8] sm:$0xff]
        %v526 = vld [vmem:[#allocation5 + $0x1e0] sm:$0xff]
        %v527 = vld [vmem:[#allocation5 + $0x1e8] sm:$0xff]
        %v528 = vld [vmem:[#allocation5 + $0x1f0] sm:$0xff]
        %v529 = vld [vmem:[#allocation5 + $0x1f8] sm:$0xff]
        %v594 = vunpack.c.l.b16 %v466
        %v595 = vunpack.c.h.b16 %v466
        %v596 = vunpack.c.l.b16 %v467
        %v597 = vunpack.c.h.b16 %v467
        %v598 = vunpack.c.l.b16 %v468
        %v599 = vunpack.c.h.b16 %v468
        %v600 = vunpack.c.l.b16 %v469
        %v601 = vunpack.c.h.b16 %v469
        %v602 = vunpack.c.l.b16 %v470
        %v603 = vunpack.c.h.b16 %v470
        %v604 = vunpack.c.l.b16 %v471
        %v605 = vunpack.c.h.b16 %v471
        %v606 = vunpack.c.l.b16 %v472
        %v607 = vunpack.c.h.b16 %v472
        %v608 = vunpack.c.l.b16 %v473
        %v609 = vunpack.c.h.b16 %v473
        %v610 = vunpack.c.l.b16 %v474
        %v611 = vunpack.c.h.b16 %v474
        %v612 = vunpack.c.l.b16 %v475
        %v613 = vunpack.c.h.b16 %v475
        %v614 = vunpack.c.l.b16 %v476
        %v615 = vunpack.c.h.b16 %v476
        %v616 = vunpack.c.l.b16 %v477
        %v617 = vunpack.c.h.b16 %v477
        %v618 = vunpack.c.l.b16 %v478
        %v619 = vunpack.c.h.b16 %v478
        %v620 = vunpack.c.l.b16 %v479
        %v621 = vunpack.c.h.b16 %v479
        %v622 = vunpack.c.l.b16 %v480
        %v623 = vunpack.c.h.b16 %v480
        %v624 = vunpack.c.l.b16 %v481
        %v625 = vunpack.c.h.b16 %v481
        %v626 = vunpack.c.l.b16 %v482
        %v627 = vunpack.c.h.b16 %v482
        %v628 = vunpack.c.l.b16 %v483
        %v629 = vunpack.c.h.b16 %v483
        %v630 = vunpack.c.l.b16 %v484
        %v631 = vunpack.c.h.b16 %v484
        %v632 = vunpack.c.l.b16 %v485
        %v633 = vunpack.c.h.b16 %v485
        %v634 = vunpack.c.l.b16 %v486
        %v635 = vunpack.c.h.b16 %v486
        %v636 = vunpack.c.l.b16 %v487
        %v637 = vunpack.c.h.b16 %v487
        %v638 = vunpack.c.l.b16 %v488
        %v639 = vunpack.c.h.b16 %v488
        %v640 = vunpack.c.l.b16 %v489
        %v641 = vunpack.c.h.b16 %v489
        %v642 = vunpack.c.l.b16 %v490
        %v643 = vunpack.c.h.b16 %v490
        %v644 = vunpack.c.l.b16 %v491
        %v645 = vunpack.c.h.b16 %v491
        %v646 = vunpack.c.l.b16 %v492
        %v647 = vunpack.c.h.b16 %v492
        %v648 = vunpack.c.l.b16 %v493
        %v649 = vunpack.c.h.b16 %v493
        %v650 = vunpack.c.l.b16 %v494
        %v651 = vunpack.c.h.b16 %v494
        %v652 = vunpack.c.l.b16 %v495
        %v653 = vunpack.c.h.b16 %v495
        %v654 = vunpack.c.l.b16 %v496
        %v655 = vunpack.c.h.b16 %v496
        %v656 = vunpack.c.l.b16 %v497
        %v657 = vunpack.c.h.b16 %v497
        %v658 = vunpack.c.l.b16 %v498
        %v659 = vunpack.c.h.b16 %v498
        %v660 = vunpack.c.l.b16 %v499
        %v661 = vunpack.c.h.b16 %v499
        %v662 = vunpack.c.l.b16 %v500
        %v663 = vunpack.c.h.b16 %v500
        %v664 = vunpack.c.l.b16 %v501
        %v665 = vunpack.c.h.b16 %v501
        %v666 = vunpack.c.l.b16 %v502
        %v667 = vunpack.c.h.b16 %v502
        %v668 = vunpack.c.l.b16 %v503
        %v669 = vunpack.c.h.b16 %v503
        %v670 = vunpack.c.l.b16 %v504
        %v671 = vunpack.c.h.b16 %v504
        %v672 = vunpack.c.l.b16 %v505
        %v673 = vunpack.c.h.b16 %v505
        %v674 = vunpack.c.l.b16 %v506
        %v675 = vunpack.c.h.b16 %v506
        %v676 = vunpack.c.l.b16 %v507
        %v677 = vunpack.c.h.b16 %v507
        %v678 = vunpack.c.l.b16 %v508
        %v679 = vunpack.c.h.b16 %v508
        %v680 = vunpack.c.l.b16 %v509
        %v681 = vunpack.c.h.b16 %v509
        %v682 = vunpack.c.l.b16 %v510
        %v683 = vunpack.c.h.b16 %v510
        %v684 = vunpack.c.l.b16 %v511
        %v685 = vunpack.c.h.b16 %v511
        %v686 = vunpack.c.l.b16 %v512
        %v687 = vunpack.c.h.b16 %v512
        %v688 = vunpack.c.l.b16 %v513
        %v689 = vunpack.c.h.b16 %v513
        %v690 = vunpack.c.l.b16 %v514
        %v691 = vunpack.c.h.b16 %v514
        %v692 = vunpack.c.l.b16 %v515
        %v693 = vunpack.c.h.b16 %v515
        %v694 = vunpack.c.l.b16 %v516
        %v695 = vunpack.c.h.b16 %v516
        %v696 = vunpack.c.l.b16 %v517
        %v697 = vunpack.c.h.b16 %v517
        %v698 = vunpack.c.l.b16 %v518
        %v699 = vunpack.c.h.b16 %v518
        %v700 = vunpack.c.l.b16 %v519
        %v701 = vunpack.c.h.b16 %v519
        %v702 = vunpack.c.l.b16 %v520
        %v703 = vunpack.c.h.b16 %v520
        %v704 = vunpack.c.l.b16 %v521
        %v705 = vunpack.c.h.b16 %v521
        %v706 = vunpack.c.l.b16 %v522
        %v707 = vunpack.c.h.b16 %v522
        %v708 = vunpack.c.l.b16 %v523
        %v709 = vunpack.c.h.b16 %v523
        %v710 = vunpack.c.l.b16 %v524
        %v711 = vunpack.c.h.b16 %v524
        %v712 = vunpack.c.l.b16 %v525
        %v713 = vunpack.c.h.b16 %v525
        %v714 = vunpack.c.l.b16 %v526
        %v715 = vunpack.c.h.b16 %v526
        %v716 = vunpack.c.l.b16 %v527
        %v717 = vunpack.c.h.b16 %v527
        %v718 = vunpack.c.l.b16 %v528
        %v719 = vunpack.c.h.b16 %v528
        %v720 = vunpack.c.l.b16 %v529
        %v721 = vunpack.c.h.b16 %v529
        %v722 = vpack.c.b16 %v602, %v594
        %v723 = vpack.c.b16 %v603, %v595
        %v724 = vpack.c.b16 %v604, %v596
        %v725 = vpack.c.b16 %v605, %v597
        %v726 = vpack.c.b16 %v606, %v598
        %v727 = vpack.c.b16 %v607, %v599
        %v728 = vpack.c.b16 %v608, %v600
        %v729 = vpack.c.b16 %v609, %v601
        %v730 = vpack.c.b16 %v618, %v610
        %v731 = vpack.c.b16 %v619, %v611
        %v732 = vpack.c.b16 %v620, %v612
        %v733 = vpack.c.b16 %v621, %v613
        %v734 = vpack.c.b16 %v622, %v614
        %v735 = vpack.c.b16 %v623, %v615
        %v736 = vpack.c.b16 %v624, %v616
        %v737 = vpack.c.b16 %v625, %v617
        %v738 = vpack.c.b16 %v634, %v626
        %v739 = vpack.c.b16 %v635, %v627
        %v740 = vpack.c.b16 %v636, %v628
        %v741 = vpack.c.b16 %v637, %v629
        %v742 = vpack.c.b16 %v638, %v630
        %v743 = vpack.c.b16 %v639, %v631
        %v744 = vpack.c.b16 %v640, %v632
        %v745 = vpack.c.b16 %v641, %v633
        %v746 = vpack.c.b16 %v650, %v642
        %v747 = vpack.c.b16 %v651, %v643
        %v748 = vpack.c.b16 %v652, %v644
        %v749 = vpack.c.b16 %v653, %v645
        %v750 = vpack.c.b16 %v654, %v646
        %v751 = vpack.c.b16 %v655, %v647
        %v752 = vpack.c.b16 %v656, %v648
        %v753 = vpack.c.b16 %v657, %v649
        %v754 = vpack.c.b16 %v666, %v658
        %v755 = vpack.c.b16 %v667, %v659
        %v756 = vpack.c.b16 %v668, %v660
        %v757 = vpack.c.b16 %v669, %v661
        %v758 = vpack.c.b16 %v670, %v662
        %v759 = vpack.c.b16 %v671, %v663
        %v760 = vpack.c.b16 %v672, %v664
        %v761 = vpack.c.b16 %v673, %v665
        %v762 = vpack.c.b16 %v682, %v674
        %v763 = vpack.c.b16 %v683, %v675
        %v764 = vpack.c.b16 %v684, %v676
        %v765 = vpack.c.b16 %v685, %v677
        %v766 = vpack.c.b16 %v686, %v678
        %v767 = vpack.c.b16 %v687, %v679
        %v768 = vpack.c.b16 %v688, %v680
        %v769 = vpack.c.b16 %v689, %v681
        %v770 = vpack.c.b16 %v698, %v690
        %v771 = vpack.c.b16 %v699, %v691
        %v772 = vpack.c.b16 %v700, %v692
        %v773 = vpack.c.b16 %v701, %v693
        %v774 = vpack.c.b16 %v702, %v694
        %v775 = vpack.c.b16 %v703, %v695
        %v776 = vpack.c.b16 %v704, %v696
        %v777 = vpack.c.b16 %v705, %v697
        %v778 = vpack.c.b16 %v714, %v706
        %v779 = vpack.c.b16 %v715, %v707
        %v780 = vpack.c.b16 %v716, %v708
        %v781 = vpack.c.b16 %v717, %v709
        %v782 = vpack.c.b16 %v718, %v710
        %v783 = vpack.c.b16 %v719, %v711
        %v784 = vpack.c.b16 %v720, %v712
        %v785 = vpack.c.b16 %v721, %v713
        %850 = vmatpush.bf16.msra.mxu0 %v778
        %851 = vmatpush.bf16.msra.mxu0 %v770
        %852 = vmatpush.bf16.msra.mxu0 %v762
        %853 = vmatpush.bf16.msra.mxu0 %v754
        %854 = vmatpush.bf16.msra.mxu0 %v746
        %855 = vmatpush.bf16.msra.mxu0 %v738
        %856 = vmatpush.bf16.msra.mxu0 %v730
        %857 = vmatpush.bf16.msra.mxu0 %v722
        %858 = vmatmul.bf16.gmra.mxu0 %v465
        %v859 = vpop.f32.mrf.mxu0
        %v860 = vadd.f32 0.0, %v859
        %v861 = vpop.f32.mrf.mxu0
        %v862 = vadd.f32 0.0, %v861
        %863 = vdwg.mxu0
        %864 = vmatpush.bf16.msra.mxu0 %v779
        %865 = vmatpush.bf16.msra.mxu0 %v771
        %866 = vmatpush.bf16.msra.mxu0 %v763
        %867 = vmatpush.bf16.msra.mxu0 %v755
        %868 = vmatpush.bf16.msra.mxu0 %v747
        %869 = vmatpush.bf16.msra.mxu0 %v739
        %870 = vmatpush.bf16.msra.mxu0 %v731
        %871 = vmatpush.bf16.msra.mxu0 %v723
        %872 = vmatmul.bf16.gmra.mxu0 %v465
        %v873 = vpop.f32.mrf.mxu0
        %v874 = vadd.f32 0.0, %v873
        %v875 = vpop.f32.mrf.mxu0
        %v876 = vadd.f32 0.0, %v875
        %877 = vdwg.mxu0
        %878 = vmatpush.bf16.msra.mxu0 %v780
        %879 = vmatpush.bf16.msra.mxu0 %v772
        %880 = vmatpush.bf16.msra.mxu0 %v764
        %881 = vmatpush.bf16.msra.mxu0 %v756
        %882 = vmatpush.bf16.msra.mxu0 %v748
        %883 = vmatpush.bf16.msra.mxu0 %v740
        %884 = vmatpush.bf16.msra.mxu0 %v732
        %885 = vmatpush.bf16.msra.mxu0 %v724
        %886 = vmatmul.bf16.gmra.mxu0 %v465
        %v887 = vpop.f32.mrf.mxu0
        %v888 = vadd.f32 0.0, %v887
        %v889 = vpop.f32.mrf.mxu0
        %v890 = vadd.f32 0.0, %v889
        %891 = vdwg.mxu0
        %892 = vmatpush.bf16.msra.mxu0 %v781
        %893 = vmatpush.bf16.msra.mxu0 %v773
        %894 = vmatpush.bf16.msra.mxu0 %v765
        %895 = vmatpush.bf16.msra.mxu0 %v757
        %896 = vmatpush.bf16.msra.mxu0 %v749
        %897 = vmatpush.bf16.msra.mxu0 %v741
        %898 = vmatpush.bf16.msra.mxu0 %v733
        %899 = vmatpush.bf16.msra.mxu0 %v725
        %900 = vmatmul.bf16.gmra.mxu0 %v465
        %v901 = vpop.f32.mrf.mxu0
        %v902 = vadd.f32 0.0, %v901
        %v903 = vpop.f32.mrf.mxu0
        %v904 = vadd.f32 0.0, %v903
        %905 = vdwg.mxu0
        %906 = vmatpush.bf16.msra.mxu0 %v782
        %907 = vmatpush.bf16.msra.mxu0 %v774
        %908 = vmatpush.bf16.msra.mxu0 %v766
        %909 = vmatpush.bf16.msra.mxu0 %v758
        %910 = vmatpush.bf16.msra.mxu0 %v750
        %911 = vmatpush.bf16.msra.mxu0 %v742
        %912 = vmatpush.bf16.msra.mxu0 %v734
        %913 = vmatpush.bf16.msra.mxu0 %v726
        %914 = vmatmul.bf16.gmra.mxu0 %v465
        %v915 = vpop.f32.mrf.mxu0
        %v916 = vadd.f32 0.0, %v915
        %v917 = vpop.f32.mrf.mxu0
        %v918 = vadd.f32 0.0, %v917
        %919 = vdwg.mxu0
        %920 = vmatpush.bf16.msra.mxu0 %v783
        %921 = vmatpush.bf16.msra.mxu0 %v775
        %922 = vmatpush.bf16.msra.mxu0 %v767
        %923 = vmatpush.bf16.msra.mxu0 %v759
        %924 = vmatpush.bf16.msra.mxu0 %v751
        %925 = vmatpush.bf16.msra.mxu0 %v743
        %926 = vmatpush.bf16.msra.mxu0 %v735
        %927 = vmatpush.bf16.msra.mxu0 %v727
        %928 = vmatmul.bf16.gmra.mxu0 %v465
        %v929 = vpop.f32.mrf.mxu0
        %v930 = vadd.f32 0.0, %v929
        %v931 = vpop.f32.mrf.mxu0
        %v932 = vadd.f32 0.0, %v931
        %933 = vdwg.mxu0
        %934 = vmatpush.bf16.msra.mxu0 %v784
        %935 = vmatpush.bf16.msra.mxu0 %v776
        %936 = vmatpush.bf16.msra.mxu0 %v768
        %937 = vmatpush.bf16.msra.mxu0 %v760
        %938 = vmatpush.bf16.msra.mxu0 %v752
        %939 = vmatpush.bf16.msra.mxu0 %v744
        %940 = vmatpush.bf16.msra.mxu0 %v736
        %941 = vmatpush.bf16.msra.mxu0 %v728
        %942 = vmatmul.bf16.gmra.mxu0 %v465
        %v943 = vpop.f32.mrf.mxu0
        %v944 = vadd.f32 0.0, %v943
        %v945 = vpop.f32.mrf.mxu0
        %v946 = vadd.f32 0.0, %v945
        %947 = vdwg.mxu0
        %948 = vmatpush.bf16.msra.mxu0 %v785
        %949 = vmatpush.bf16.msra.mxu0 %v777
        %950 = vmatpush.bf16.msra.mxu0 %v769
        %951 = vmatpush.bf16.msra.mxu0 %v761
        %952 = vmatpush.bf16.msra.mxu0 %v753
        %953 = vmatpush.bf16.msra.mxu0 %v745
        %954 = vmatpush.bf16.msra.mxu0 %v737
        %955 = vmatpush.bf16.msra.mxu0 %v729
        %956 = vmatmul.bf16.gmra.mxu0 %v465
        %v957 = vpop.f32.mrf.mxu0
        %v958 = vadd.f32 0.0, %v957
        %v959 = vpop.f32.mrf.mxu0
        %v960 = vadd.f32 0.0, %v959
        %961 = vdwg.mxu0
        %p962 = scmp.eq.s32.totalorder %s28, 0
        // Predicated region
        $region57: #{tpu_custom_call.1} parent=47 // pred_check
          %p963 = pneg %p962
        $region58: #{tpu_custom_call.1} parent=47 // pred_check_branch
          %965 = sbr.rel (%p963) target = $region60
        $region59: #{tpu_custom_call.1} parent=47 // pred_region
          %966 = vst [vmem:[%s328] sm:$0xff] -inf
        $region60: #{tpu_custom_call.1} parent=47 // pred_fallthru
          _
        %v967 = vld [vmem:[%s328] sm:$0xff]
        %v968 = vmax.f32 %v860, %v862
        %v969 = vrot.slane %v968, 4
        %v970 = vmax.f32 %v968, %v969
        %v971 = vrot.slane %v970, 2
        %v972 = vmax.f32 %v970, %v971
        %v973 = vrot.slane %v972, 1
        %v974 = vmax.f32 %v972, %v973
        %v975 = vmax.f32 %v874, %v876
        %v976 = vrot.slane %v975, 4
        %v977 = vmax.f32 %v975, %v976
        %v978 = vrot.slane %v977, 2
        %v979 = vmax.f32 %v977, %v978
        %v980 = vrot.slane %v979, 1
        %v981 = vmax.f32 %v979, %v980
        %v982 = vmax.f32 %v888, %v890
        %v983 = vrot.slane %v982, 4
        %v984 = vmax.f32 %v982, %v983
        %v985 = vrot.slane %v984, 2
        %v986 = vmax.f32 %v984, %v985
        %v987 = vrot.slane %v986, 1
        %v988 = vmax.f32 %v986, %v987
        %v989 = vmax.f32 %v902, %v904
        %v990 = vrot.slane %v989, 4
        %v991 = vmax.f32 %v989, %v990
        %v992 = vrot.slane %v991, 2
        %v993 = vmax.f32 %v991, %v992
        %v994 = vrot.slane %v993, 1
        %v995 = vmax.f32 %v993, %v994
        %v996 = vmax.f32 %v916, %v918
        %v997 = vrot.slane %v996, 4
        %v998 = vmax.f32 %v996, %v997
        %v999 = vrot.slane %v998, 2
        %v1000 = vmax.f32 %v998, %v999
        %v1001 = vrot.slane %v1000, 1
        %v1002 = vmax.f32 %v1000, %v1001
        %v1003 = vmax.f32 %v930, %v932
        %v1004 = vrot.slane %v1003, 4
        %v1005 = vmax.f32 %v1003, %v1004
        %v1006 = vrot.slane %v1005, 2
        %v1007 = vmax.f32 %v1005, %v1006
        %v1008 = vrot.slane %v1007, 1
        %v1009 = vmax.f32 %v1007, %v1008
        %v1010 = vmax.f32 %v944, %v946
        %v1011 = vrot.slane %v1010, 4
        %v1012 = vmax.f32 %v1010, %v1011
        %v1013 = vrot.slane %v1012, 2
        %v1014 = vmax.f32 %v1012, %v1013
        %v1015 = vrot.slane %v1014, 1
        %v1016 = vmax.f32 %v1014, %v1015
        %v1017 = vmax.f32 %v958, %v960
        %v1018 = vrot.slane %v1017, 4
        %v1019 = vmax.f32 %v1017, %v1018
        %v1020 = vrot.slane %v1019, 2
        %v1021 = vmax.f32 %v1019, %v1020
        %v1022 = vrot.slane %v1021, 1
        %v1023 = vmax.f32 %v1021, %v1022
        %v1032 = vrot.slane %v981, 7
        %v1033 = vrot.slane %v988, 6
        %v1034 = vrot.slane %v995, 5
        %v1035 = vrot.slane %v1002, 4
        %v1036 = vrot.slane %v1009, 3
        %v1037 = vrot.slane %v1016, 2
        %v1038 = vrot.slane %v1023, 1
        %vm1039 = vcmask 1040384
        %v1040 = vsel %vm1039, %v974, %v1032
        %vm1041 = vcmask 1042434
        %v1042 = vsel %vm1041, %v1033, %v1034
        %vm1043 = vcmask 1041408
        %v1044 = vsel %vm1043, %v1040, %v1042
        %vm1045 = vcmask 1044484
        %v1046 = vsel %vm1045, %v1035, %v1036
        %vm1047 = vcmask 1046534
        %v1048 = vsel %vm1047, %v1037, %v1038
        %vm1049 = vcmask 1045508
        %v1050 = vsel %vm1049, %v1046, %v1048
        %vm1051 = vcmask 1043456
        %v1052 = vsel %vm1051, %v1044, %v1050
        %v1054 = vmax.f32 %v967, %v1052
        %1055 = vst [vmem:[%s328] sm:$0xff] %v1054
        // Predicated region
        $region61: #{tpu_custom_call.1} parent=47 // pred_check
          %p1056 = pneg %p962
        $region62: #{tpu_custom_call.1} parent=47 // pred_check_branch
          %1058 = sbr.rel (%p1056) target = $region64
        $region63: #{tpu_custom_call.1} parent=47 // pred_region
          %v1059 = vld [vmem:[%s328] sm:$0xff]
          %v1060 = vld [vmem:[%s6] sm:$0xff]
          %v1061 = vadd.f32 %v1059, %v1060
          %v1062 = vmax.f32 %v1061, 0.0
          %1063 = vst [vmem:[%s328] sm:$0xff] %v1062
        $region64: #{tpu_custom_call.1} parent=47 // pred_fallthru
          _
        %s1064 = sand.u32 %s197, 1
        %s1065 = scalar_lea.sflag [#allocation4], %s1064
        %s1066 = sand.u32 %s197, 1
        %s1067 = smul.addr %s1066, 8
        %s1068 = scalar_lea.vmem [#allocation7], %s1067
        // Predicated region
        $region65: #{tpu_custom_call.1} parent=47 // pred_check
          %p1069 = pneg %p207
        $region66: #{tpu_custom_call.1} parent=47 // pred_check_branch
          %1071 = sbr.rel (%p1069) target = $region68
        $region67: #{tpu_custom_call.1} parent=47 // pred_region
          %1073 = vsyncadd %s1065, 0
          %s1074 = smul.addr %s27, 8
          %s1075 = scalar_lea.hbm %s7, %s1074
          %s1077 = sshll.u32 %s1068, 4
          %s1078 = int_to_ptr.vmem [resolvable:$true] %s1077
          %s1079 = sshll.u32 %s1075, 4
          %s1080 = int_to_ptr.hbm [resolvable:$true] %s1079
          %1082 = dma.vmem_to_hbm [thread:$0]  %s1078, 128, %s1080, %s1065
        $region68: #{tpu_custom_call.1} parent=47 // pred_fallthru
          _
      $region48: #{tpu_custom_call.1} parent=5 // pred_fallthru
        _
      %p1083 = scmp.le.s32.totalorder 2, %s18
      // Predicated region
      $region69: #{tpu_custom_call.1} parent=5 // pred_check
        %p1084 = pneg %p1083
      $region70: #{tpu_custom_call.1} parent=5 // pred_check_branch
        %1086 = sbr.rel (%p1084) target = $region72
      $region71: #{tpu_custom_call.1} parent=5 // pred_region
        %s1087 = ssub.s32 %s18, 2
        // Predicated region
        $region73: #{tpu_custom_call.1} parent=71 // pred_check
          %p1088 = pneg %p213
        $region74: #{tpu_custom_call.1} parent=71 // pred_check_branch
          %1090 = sbr.rel (%p1088) target = $region76
        $region75: #{tpu_custom_call.1} parent=71 // pred_region
          %s1091 = sand.u32 %s198, 1
          %s1092 = scalar_lea.sflag [#allocation4], %s1091
          %s1093 = sand.u32 %s198, 1
          %s1094 = smul.addr %s1093, 8
          %s1095 = scalar_lea.vmem [#allocation7], %s1094
          %1097 = dma.done %s1092, 128
        $region76: #{tpu_custom_call.1} parent=71 // pred_fallthru
          _
      $region72: #{tpu_custom_call.1} parent=5 // pred_fallthru
        _
    $region6: #{tpu_custom_call.1} parent=1 // loop_footer
      %s22 = sadd.s32 1, %s18
    $region7: #{tpu_custom_call.1} parent=1 // loop_footer_branch
      %17 = sbr.rel target = $region3
    $region8: #{tpu_custom_call.1} parent=1 // loop_exit
      _
    %1098 = vsyncpa [#allocation3], 1
    %s1099 = scalar_lea.sflag [#allocation3], 1
    %1100 = vsyncpa %s1099, 1
    %1101 = vsyncpa [#allocation6], 1
    %1102 = vsyncpa [#allocation4], 1
    %s1103 = scalar_lea.sflag [#allocation4], 1
    %1104 = vsyncpa %s1103, 1

</llo_original>
